<compile_context>
chip_gen: v7x
topology: tpu7x:2x2x1
jax: 0.10.0
libtpu: 0.0.40
codegen_flags: <defaults>
</compile_context>

<pallas_src>
import jax
import jax.numpy as jnp
from jax.experimental import pallas as pl
from jax.experimental.pallas import tpu as pltpu


def _transition_kernel(x_ref, scale_ref, shift_ref, w_ref, pool_ref, o_ref):
    # x_ref:     (1, C_in, TL)      NCL tile (native dtype): channels on sublanes, length on lanes
    # scale_ref: (C_in, 1)  f32     gamma / sqrt(var + eps)
    # shift_ref: (C_in, 1)  f32     beta - mean * scale
    # w_ref:     (C_out, C_in) bf16 1x1 conv weight
    # pool_ref:  (CHUNK, CHUNK//2) bf16  pair-average block: 0.5 at rows 2i,2i+1 of col i
    # o_ref:     (1, C_out, TL//2)  output tile (native dtype), NCL layout
    chunk = pool_ref.shape[0]
    half = pool_ref.shape[1]
    n_chunks = x_ref.shape[2] // chunk

    scale = scale_ref[...]
    shift = shift_ref[...]
    w = w_ref[...]
    pool = pool_ref[...]

    # Static (trace-time) chunk loop: slices are lane-tile aligned (chunk is a
    # multiple of 128 whenever n_chunks > 1), so each slice is a clean view.
    for c in range(n_chunks):
        xc = x_ref[0, :, c * chunk:(c + 1) * chunk]                  # (C_in, CHUNK)
        # Folded BN + ReLU in f32 on the VPU.
        h = jnp.maximum(xc.astype(jnp.float32) * scale + shift, 0.0)
        # Pair-average along lanes via a small block-diagonal pool matrix (MXU,
        # bf16 operands / f32 accumulation).  Pool entries (0.0 / 0.5) are exact
        # in bf16.
        pooled = jnp.dot(h.astype(jnp.bfloat16), pool,
                         preferred_element_type=jnp.float32)          # (C_in, CHUNK//2)
        # 1x1 conv on the pooled length (channel mixing only, so it commutes
        # with the average pooling).
        y = jnp.dot(w, pooled.astype(jnp.bfloat16),
                    preferred_element_type=jnp.float32)               # (C_out, CHUNK//2)
        o_ref[0, :, c * half:(c + 1) * half] = y.astype(o_ref.dtype)


def _vmem_budget_bytes():
    """Per-step VMEM budget for tile selection (generation-aware when possible)."""
    cap = 64 * 1024 * 1024  # conservative default (v7x physical VMEM per TC)
    try:
        cap = pltpu.get_tpu_info().vmem_capacity_bytes
    except Exception:
        pass
    return min(cap // 4, 20 * 1024 * 1024)


def _pick_length_tile(l_pad, c_in, c_out, x_bytes, out_bytes, budget):
    """Largest TL (multiple of 256 dividing l_pad, capped at 4096) whose
    double-buffered per-step footprint fits the budget.  For short inputs
    (l_pad < 256) a single full-length tile is used."""
    if l_pad < 256:
        return l_pad
    best = 256
    t = 256
    cap = min(l_pad, 4096)
    while t <= cap:
        if l_pad % t == 0:
            chunk = 512 if t % 512 == 0 else 256
            per_step = (2 * c_in * t * x_bytes                 # x tile, double-buffered
                        + 2 * c_out * (t // 2) * out_bytes     # out tile
                        + 2 * c_out * c_in * 2                 # bf16 conv weight
                        + 2 * chunk * (chunk // 2) * 2         # bf16 pool block
                        + 2 * 2 * c_in * 4)                    # scale + shift
            if per_step <= budget:
                best = t
        t += 256
    return best


def transition_forward(x_ncl, conv_w, bn_gamma, bn_beta, bn_mean, bn_var, eps=1e-5):
    """x_ncl: (N, C_in, L). conv_w: (C_out, C_in) or (C_out, C_in, 1)."""
    N, C_in, L = x_ncl.shape
    C_out = conv_w.shape[0]
    assert L >= 2

    out_dtype = x_ncl.dtype
    x_bytes = jnp.dtype(x_ncl.dtype).itemsize
    out_bytes = jnp.dtype(out_dtype).itemsize

    # PyTorch AvgPool1d(2, 2) drops a trailing odd element.
    L_even = L - (L % 2)
    L_out = L_even // 2
    x = x_ncl[..., :L_even] if L_even != L else x_ncl

    # Pad length up to a multiple of 256 so TL//2 stays a multiple of 128
    # (unmasked lane-dense output stores); padded columns are cropped afterwards.
    if L_even >= 256:
        L_pad = ((L_even + 255) // 256) * 256
    else:
        L_pad = L_even
    if L_pad != L_even:
        x = jnp.pad(x, ((0, 0), (0, 0), (0, L_pad - L_even)))

    TL = _pick_length_tile(L_pad, C_in, C_out, x_bytes, out_bytes, _vmem_budget_bytes())
    assert TL % 2 == 0 and L_pad % TL == 0

    # Pooling chunk: 512 lanes -> 256-wide pooled RHS (good for v6e/v7x 256-wide MXU).
    if TL % 512 == 0:
        chunk = 512
    elif TL % 256 == 0:
        chunk = 256
    else:
        chunk = TL  # short-input single-tile case

    # Fold BN (eval mode) into per-channel scale/shift (f32), broadcast along lanes.
    inv_std = jax.lax.rsqrt(bn_var.astype(jnp.float32) + eps)
    scale_v = bn_gamma.astype(jnp.float32) * inv_std
    shift_v = bn_beta.astype(jnp.float32) - bn_mean.astype(jnp.float32) * scale_v
    scale = scale_v.reshape(C_in, 1)
    shift = shift_v.reshape(C_in, 1)

    # 1x1 conv weight as the bf16 matmul LHS.
    w = jnp.asarray(conv_w).reshape(C_out, C_in).astype(jnp.bfloat16)

    # Small block-diagonal pooling block: rows 2i and 2i+1 of column i hold 0.5.
    rows = jnp.arange(chunk)[:, None]
    cols = jnp.arange(chunk // 2)[None, :]
    pool = (((rows // 2) == cols).astype(jnp.bfloat16) * 0.5).astype(jnp.bfloat16)

    num_l = L_pad // TL
    # Put the larger axis first so a v7x megacore always has a splittable
    # parallel axis (e.g. N == 1 inference with many length tiles).
    if N >= num_l:
        grid = (N, num_l)
        xo_map = lambda b, l: (b, 0, l)
    else:
        grid = (num_l, N)
        xo_map = lambda l, b: (b, 0, l)
    const_map = lambda i, j: (0, 0)

    flops = N * L_pad * C_in * (chunk + C_out)         # pooling + conv MACs * 2
    bytes_accessed = (N * C_in * L_pad * x_bytes
                      + N * C_out * (L_pad // 2) * out_bytes
                      + C_out * C_in * 2 + chunk * (chunk // 2) * 2 + 2 * C_in * 4)

    out = pl.pallas_call(
        _transition_kernel,
        out_shape=jax.ShapeDtypeStruct((N, C_out, L_pad // 2), out_dtype),
        grid_spec=pltpu.PrefetchScalarGridSpec(
            num_scalar_prefetch=0,
            grid=grid,
            in_specs=[
                pl.BlockSpec((1, C_in, TL), xo_map),
                pl.BlockSpec((C_in, 1), const_map),
                pl.BlockSpec((C_in, 1), const_map),
                pl.BlockSpec((C_out, C_in), const_map),
                pl.BlockSpec((chunk, chunk // 2), const_map),
            ],
            out_specs=pl.BlockSpec((1, C_out, TL // 2), xo_map),
        ),
        compiler_params=pltpu.CompilerParams(
            dimension_semantics=("parallel", "parallel"),
            vmem_limit_bytes=32 * 1024 * 1024,
        ),
        cost_estimate=pl.CostEstimate(
            flops=flops, transcendentals=0, bytes_accessed=bytes_accessed,
        ),
    )(x, scale, shift, w, pool)

    # Crop away padded / truncated-odd columns; already in PyTorch NCL layout.
    if L_pad // 2 != L_out:
        out = out[..., :L_out]
    return out


def _reference(x_ncl, conv_w, bn_gamma, bn_beta, bn_mean, bn_var, eps=1e-5):
    # Pure-JAX f32 reference in the exact PyTorch order: BN -> ReLU -> conv -> avg_pool.
    x = x_ncl.astype(jnp.float32)
    scale = bn_gamma / jnp.sqrt(bn_var + eps)
    shift = bn_beta - bn_mean * scale
    h = jnp.maximum(x * scale[None, :, None] + shift[None, :, None], 0.0)
    y = jnp.einsum("ncl,oc->nol", h, conv_w.astype(jnp.float32))
    N, C_out, L = y.shape
    L_even = L - (L % 2)
    y = y[..., :L_even]
    return y.reshape(N, C_out, L_even // 2, 2).mean(axis=-1)


if __name__ == "__main__":
    N, C_in, C_out, L = 2, 8, 4, 16

    key = jax.random.PRNGKey(0)
    kx, kw, kg, kb, km, kv = jax.random.split(key, 6)

    x = jax.random.normal(kx, (N, C_in, L), dtype=jnp.float32)

    # Deterministic synthetic parameters (shapes from the module's __init__).
    conv_w = jax.random.normal(kw, (C_out, C_in), dtype=jnp.float32) * 0.1  # Conv1d weight (k=1)
    bn_gamma = 1.0 + 0.1 * jax.random.normal(kg, (C_in,), dtype=jnp.float32)
    bn_beta = 0.1 * jax.random.normal(kb, (C_in,), dtype=jnp.float32)
    bn_mean = 0.1 * jax.random.normal(km, (C_in,), dtype=jnp.float32)
    bn_var = jnp.abs(1.0 + 0.1 * jax.random.normal(kv, (C_in,), dtype=jnp.float32))

    out = transition_forward(x, conv_w, bn_gamma, bn_beta, bn_mean, bn_var)
    out = jax.block_until_ready(out)

    ref = _reference(x, conv_w, bn_gamma, bn_beta, bn_mean, bn_var)
    assert out.shape == (N, C_out, L // 2)
    # bf16 matmul operands with f32 accumulation -> looser tolerance vs f32 reference.
    assert jnp.allclose(out.astype(jnp.float32), ref, atol=3e-2, rtol=3e-2)

    print("KERNEL_OK")
</pallas_src>

<mosaic_0001>
module attributes {stable_mosaic.version = 11 : i64} {
  func.func @_transition_kernel(%arg0: i32, %arg1: i32, %arg2: memref<1x8x16xf32, #tpu.memory_space<vmem>>, %arg3: memref<8x1xf32, #tpu.memory_space<vmem>>, %arg4: memref<8x1xf32, #tpu.memory_space<vmem>>, %arg5: memref<4x8xbf16, #tpu.memory_space<vmem>>, %arg6: memref<16x8xbf16, #tpu.memory_space<vmem>>, %arg7: memref<1x4x8xf32, #tpu.memory_space<vmem>>) attributes {dimension_semantics = [#tpu.dimension_semantics<parallel>, #tpu.dimension_semantics<parallel>], iteration_bounds = array<i64: 2, 1>, scalar_prefetch = 0 : i64, scratch_operands = 0 : i64, tpu.core_type = #tpu.core_type<tc>, window_params = [{transform_indices = @transform_0, window_bounds = array<i64: 1, 8, 16>}, {pipeline_mode = #tpu.pipeline_mode<synchronous>, transform_indices = @transform_1, window_bounds = array<i64: 8, 1>}, {pipeline_mode = #tpu.pipeline_mode<synchronous>, transform_indices = @transform_2, window_bounds = array<i64: 8, 1>}, {pipeline_mode = #tpu.pipeline_mode<synchronous>, transform_indices = @transform_3, window_bounds = array<i64: 4, 8>}, {pipeline_mode = #tpu.pipeline_mode<synchronous>, transform_indices = @transform_4, window_bounds = array<i64: 16, 8>}, {transform_indices = @transform_5, window_bounds = array<i64: 1, 4, 8>}]} {
    %c0 = arith.constant 0 : index
    %c0_0 = arith.constant 0 : index
    %0 = vector.load %arg3[%c0, %c0_0] : memref<8x1xf32, #tpu.memory_space<vmem>>, vector<8x1xf32>
    %c0_1 = arith.constant 0 : index
    %c0_2 = arith.constant 0 : index
    %1 = vector.load %arg4[%c0_1, %c0_2] : memref<8x1xf32, #tpu.memory_space<vmem>>, vector<8x1xf32>
    %c0_3 = arith.constant 0 : index
    %c0_4 = arith.constant 0 : index
    %2 = vector.load %arg5[%c0_3, %c0_4] : memref<4x8xbf16, #tpu.memory_space<vmem>>, vector<4x8xbf16>
    %c0_5 = arith.constant 0 : index
    %c0_6 = arith.constant 0 : index
    %3 = vector.load %arg6[%c0_5, %c0_6] : memref<16x8xbf16, #tpu.memory_space<vmem>>, vector<16x8xbf16>
    %c0_7 = arith.constant 0 : index
    %c0_8 = arith.constant 0 : index
    %c0_9 = arith.constant 0 : index
    %4 = vector.load %arg2[%c0_7, %c0_8, %c0_9] : memref<1x8x16xf32, #tpu.memory_space<vmem>>, vector<1x8x16xf32>
    %5 = vector.shape_cast %4 : vector<1x8x16xf32> to vector<8x16xf32>
    %6 = vector.broadcast %0 : vector<8x1xf32> to vector<8x16xf32>
    %7 = arith.mulf %5, %6 : vector<8x16xf32>
    %8 = vector.broadcast %1 : vector<8x1xf32> to vector<8x16xf32>
    %9 = arith.addf %7, %8 : vector<8x16xf32>
    %cst = arith.constant 0.000000e+00 : f32
    %10 = vector.broadcast %cst : f32 to vector<8x16xf32>
    %11 = arith.maximumf %9, %10 : vector<8x16xf32>
    %12 = arith.truncf %11 : vector<8x16xf32> to vector<8x16xbf16>
    %cst_10 = arith.constant dense<0.000000e+00> : vector<8x8xf32>
    %13 = tpu.matmul %12, %3, %cst_10 {dimension_numbers = #tpu.dot_dimension_numbers<[1], [0], [0], [1], [0, 0, 1, 1], [], []>} : vector<8x16xbf16>, vector<16x8xbf16>, vector<8x8xf32> -> vector<8x8xf32>
    %14 = arith.truncf %13 : vector<8x8xf32> to vector<8x8xbf16>
    %cst_11 = arith.constant dense<0.000000e+00> : vector<4x8xf32>
    %15 = tpu.matmul %2, %14, %cst_11 {dimension_numbers = #tpu.dot_dimension_numbers<[1], [0], [0], [1], [0, 0, 1, 1], [], []>} : vector<4x8xbf16>, vector<8x8xbf16>, vector<4x8xf32> -> vector<4x8xf32>
    %c0_12 = arith.constant 0 : index
    %c0_13 = arith.constant 0 : index
    %c0_14 = arith.constant 0 : index
    %16 = vector.load %arg7[%c0_12, %c0_13, %c0_14] : memref<1x4x8xf32, #tpu.memory_space<vmem>>, vector<1x4x8xf32>
    %17 = vector.shape_cast %16 : vector<1x4x8xf32> to vector<4x8xf32>
    %18 = vector.shape_cast %15 : vector<4x8xf32> to vector<1x4x8xf32>
    tpu.vector_store %arg7[%c0_12, %c0_13, %c0_14], %18 {strides = array<i32>} : memref<1x4x8xf32, #tpu.memory_space<vmem>>, vector<1x4x8xf32>,
    return
  }
  func.func @transform_0(%arg0: i32, %arg1: i32) -> (i32, i32, i32) {
    %c0_i32 = arith.constant 0 : i32
    %c0_i32_0 = arith.constant 0 : i32
    return %arg0, %c0_i32, %arg1 : i32, i32, i32
  }
  func.func @transform_1(%arg0: i32, %arg1: i32) -> (i32, i32) {
    %c0_i32 = arith.constant 0 : i32
    %c0_i32_0 = arith.constant 0 : i32
    %c0_i32_1 = arith.constant 0 : i32
    return %c0_i32, %c0_i32_0 : i32, i32
  }
  func.func @transform_2(%arg0: i32, %arg1: i32) -> (i32, i32) {
    %c0_i32 = arith.constant 0 : i32
    %c0_i32_0 = arith.constant 0 : i32
    %c0_i32_1 = arith.constant 0 : i32
    return %c0_i32, %c0_i32_0 : i32, i32
  }
  func.func @transform_3(%arg0: i32, %arg1: i32) -> (i32, i32) {
    %c0_i32 = arith.constant 0 : i32
    %c0_i32_0 = arith.constant 0 : i32
    %c0_i32_1 = arith.constant 0 : i32
    return %c0_i32, %c0_i32_0 : i32, i32
  }
  func.func @transform_4(%arg0: i32, %arg1: i32) -> (i32, i32) {
    %c0_i32 = arith.constant 0 : i32
    %c0_i32_0 = arith.constant 0 : i32
    %c0_i32_1 = arith.constant 0 : i32
    return %c0_i32, %c0_i32_0 : i32, i32
  }
  func.func @transform_5(%arg0: i32, %arg1: i32) -> (i32, i32, i32) {
    %c0_i32 = arith.constant 0 : i32
    %c0_i32_0 = arith.constant 0 : i32
    return %arg0, %c0_i32, %arg1 : i32, i32, i32
  }
}

</mosaic_0001>

<llo_original>
// kernel: tpu_custom_call.1
$region0: #{tpu_custom_call.1}
  #allocation0 [shape = 'u32[]', space=smem, size = 0x4, offset = 0x4, fixed_abs, tag = 'smem constant byte address 0x4 - core index']
  #allocation1 [shape = 'u32[144,128]{1,0:T(1,128)}', space=vmem, size = 0x12000, scoped, tag = 'internal scratch']
  %s0 = inlined_call_operand.vmem [shape: f32[2,8,16], index: 0, kind: input, shape index: {}]
  %s1 = inlined_call_operand.vmem [shape: f32[8,1], index: 1, kind: input, shape index: {}]
  %s2 = inlined_call_operand.vmem [shape: f32[8,1], index: 2, kind: input, shape index: {}]
  %s3 = inlined_call_operand.vmem [shape: bf16[4,8], index: 3, kind: input, shape index: {}]
  %s4 = inlined_call_operand.vmem [shape: bf16[16,8], index: 4, kind: input, shape index: {}]
  %s5 = inlined_call_operand.hbm [shape: f32[2,4,8], index: 5, kind: output, shape index: {}]
  %s6 = sld [smem:[#allocation0]]
  $region53: #{tpu_custom_call.1} parent=0
    _
  %s8 = ssub.s32 1, %s6
  %s9 = scalar_select 0, %s8, %s6
  $region1: #{tpu_custom_call.1} parent=0
    #allocation2 [shape = 'u8[4096]{0}', space=vmem, size = 0x1000, scoped, tag = 'output window, operand 0']
    #allocation3 [shape = 's32[2]{0}', space=sflag, size = 0x8, scoped, tag = 'scoped memory for tpu_custom_call.1']
    %10 = vsyncpa [#allocation3], 0
    %s11 = scalar_lea.sflag [#allocation3], 1
    %12 = vsyncpa %s11, 0
    loop: start=0, step=1, limit=4
    $region2: #{tpu_custom_call.1} parent=1 // loop_pre_header
      _
    $region3: #{tpu_custom_call.1} parent=1 // loop_header
      %s14 = sphi 0, %s18
      %p15 = scmp.ge.s32.totalorder %s14, 4
      %s21 = sphi 0, %s33
      %s22 = sphi 0, %s29
      %s23 = sphi 0, %s21
      %s24 = sphi 0, %s22
      %s25 = sphi 0, %s23
      %s26 = sphi 0, %s24
      %s38 = sphi 0, %s40
      %s41 = sphi 0, %s38
      %s42 = sphi 0, %s41
      %s58 = sphi 0, %s42
      %s62 = sphi 0, %s62
      %s64 = sphi 0, %s62
      %s65 = sphi 0, %s64
      %s79 = sphi 0, %s65
      %s83 = sphi 0, %s83
      %s85 = sphi 0, %s83
      %s86 = sphi 0, %s85
      %s100 = sphi 0, %s86
      %s104 = sphi 0, %s104
      %s106 = sphi 0, %s104
      %s107 = sphi 0, %s106
      %s121 = sphi 0, %s107
      %s125 = sphi 0, %s125
      %s127 = sphi 0, %s125
      %s128 = sphi 0, %s127
      %s142 = sphi 0, %s128
      %s150 = sphi 0, %s152
      %s153 = sphi 0, %s150
      %s154 = sphi 0, %s153
      %s170 = sphi 0, %s154
    $region4: #{tpu_custom_call.1} parent=1 // loop_header_branch
      %17 = sbr.rel (%p15) target = $region8
    $region5: #{tpu_custom_call.1} parent=1 // loop_body
      %s19 = ssub.s32 %s14, 1
      %s20 = ssub.s32 %s14, 2
      %s27 = sadd.s32 1, %s22
      %p28 = scmp.ge.s32.totalorder %s27, 1
      %s29 = scalar_select %p28, 0, %s27
      %s30 = sadd.s32 1, %s21
      %s31 = scalar_select %p28, %s30, %s21
      %p32 = scmp.ge.s32.totalorder %s31, 2
      %s33 = scalar_select %p32, 0, %s31
      %s34 = ssub.s32 %s21, %s33
      %s35 = ssub.s32 %s22, %s29
      %s36 = sor.u32 %s34, %s35
      %p37 = scmp.eq.s32.totalorder %s36, 0
      %s39 = sadd.s32 %s38, 1
      %s40 = scalar_select %p37, %s38, %s39
      %p43 = pneg %p37
      %p44 = scmp.eq.s32.totalorder %s14, 1
      %p45 = por %p43, %p44
      %p46 = scmp.ne.s32.totalorder %s38, %s41
      %p47 = scmp.eq.s32.totalorder %s14, 0
      %p48 = por %p46, %p47
      %p49 = scmp.ne.s32.totalorder %s38, %s41
      %p50 = scmp.eq.s32.totalorder %s19, 1
      %p51 = por %p49, %p50
      %p52 = scmp.ne.s32.totalorder %s41, %s42
      %p53 = scmp.eq.s32.totalorder %s19, 0
      %p54 = por %p52, %p53
      %p55 = scmp.ne.s32.totalorder %s41, %s42
      %p56 = scmp.eq.s32.totalorder %s20, 1
      %p57 = por %p55, %p56
      %p59 = scmp.ne.s32.totalorder %s42, %s58
      %p60 = scmp.eq.s32.totalorder %s20, 0
      %p61 = por %p59, %p60
      %s63 = sadd.s32 %s62, 1
      %p66 = scmp.eq.s32.totalorder %s14, 1
      %p67 = scmp.ne.s32.totalorder %s62, %s64
      %p68 = scmp.eq.s32.totalorder %s14, 0
      %p69 = por %p67, %p68
      %p70 = scmp.ne.s32.totalorder %s62, %s64
      %p71 = scmp.eq.s32.totalorder %s19, 1
      %p72 = por %p70, %p71
      %p73 = scmp.ne.s32.totalorder %s64, %s65
      %p74 = scmp.eq.s32.totalorder %s19, 0
      %p75 = por %p73, %p74
      %p76 = scmp.ne.s32.totalorder %s64, %s65
      %p77 = scmp.eq.s32.totalorder %s20, 1
      %p78 = por %p76, %p77
      %p80 = scmp.ne.s32.totalorder %s65, %s79
      %p81 = scmp.eq.s32.totalorder %s20, 0
      %p82 = por %p80, %p81
      %s84 = sadd.s32 %s83, 1
      %p87 = scmp.eq.s32.totalorder %s14, 1
      %p88 = scmp.ne.s32.totalorder %s83, %s85
      %p89 = scmp.eq.s32.totalorder %s14, 0
      %p90 = por %p88, %p89
      %p91 = scmp.ne.s32.totalorder %s83, %s85
      %p92 = scmp.eq.s32.totalorder %s19, 1
      %p93 = por %p91, %p92
      %p94 = scmp.ne.s32.totalorder %s85, %s86
      %p95 = scmp.eq.s32.totalorder %s19, 0
      %p96 = por %p94, %p95
      %p97 = scmp.ne.s32.totalorder %s85, %s86
      %p98 = scmp.eq.s32.totalorder %s20, 1
      %p99 = por %p97, %p98
      %p101 = scmp.ne.s32.totalorder %s86, %s100
      %p102 = scmp.eq.s32.totalorder %s20, 0
      %p103 = por %p101, %p102
      %s105 = sadd.s32 %s104, 1
      %p108 = scmp.eq.s32.totalorder %s14, 1
      %p109 = scmp.ne.s32.totalorder %s104, %s106
      %p110 = scmp.eq.s32.totalorder %s14, 0
      %p111 = por %p109, %p110
      %p112 = scmp.ne.s32.totalorder %s104, %s106
      %p113 = scmp.eq.s32.totalorder %s19, 1
      %p114 = por %p112, %p113
      %p115 = scmp.ne.s32.totalorder %s106, %s107
      %p116 = scmp.eq.s32.totalorder %s19, 0
      %p117 = por %p115, %p116
      %p118 = scmp.ne.s32.totalorder %s106, %s107
      %p119 = scmp.eq.s32.totalorder %s20, 1
      %p120 = por %p118, %p119
      %p122 = scmp.ne.s32.totalorder %s107, %s121
      %p123 = scmp.eq.s32.totalorder %s20, 0
      %p124 = por %p122, %p123
      %s126 = sadd.s32 %s125, 1
      %p129 = scmp.eq.s32.totalorder %s14, 1
      %p130 = scmp.ne.s32.totalorder %s125, %s127
      %p131 = scmp.eq.s32.totalorder %s14, 0
      %p132 = por %p130, %p131
      %p133 = scmp.ne.s32.totalorder %s125, %s127
      %p134 = scmp.eq.s32.totalorder %s19, 1
      %p135 = por %p133, %p134
      %p136 = scmp.ne.s32.totalorder %s127, %s128
      %p137 = scmp.eq.s32.totalorder %s19, 0
      %p138 = por %p136, %p137
      %p139 = scmp.ne.s32.totalorder %s127, %s128
      %p140 = scmp.eq.s32.totalorder %s20, 1
      %p141 = por %p139, %p140
      %p143 = scmp.ne.s32.totalorder %s128, %s142
      %p144 = scmp.eq.s32.totalorder %s20, 0
      %p145 = por %p143, %p144
      %s146 = ssub.s32 %s21, %s33
      %s147 = ssub.s32 %s22, %s29
      %s148 = sor.u32 %s146, %s147
      %p149 = scmp.eq.s32.totalorder %s148, 0
      %s151 = sadd.s32 %s150, 1
      %s152 = scalar_select %p149, %s150, %s151
      %p155 = pneg %p149
      %p156 = scmp.eq.s32.totalorder %s14, 1
      %p157 = por %p155, %p156
      %p158 = scmp.ne.s32.totalorder %s150, %s153
      %p159 = scmp.eq.s32.totalorder %s14, 0
      %p160 = por %p158, %p159
      %p161 = scmp.ne.s32.totalorder %s150, %s153
      %p162 = scmp.eq.s32.totalorder %s19, 1
      %p163 = por %p161, %p162
      %p164 = scmp.ne.s32.totalorder %s153, %s154
      %p165 = scmp.eq.s32.totalorder %s19, 0
      %p166 = por %p164, %p165
      %p167 = scmp.ne.s32.totalorder %s153, %s154
      %p168 = scmp.eq.s32.totalorder %s20, 1
      %p169 = por %p167, %p168
      %p171 = scmp.ne.s32.totalorder %s154, %s170
      %p172 = scmp.eq.s32.totalorder %s20, 0
      %p173 = por %p171, %p172
      %p174 = scmp.le.s32.totalorder 1, %s14
      %p175 = scmp.lt.s32.totalorder %s14, 3
      %p176 = pnand %p174, %p175
      %p177 = pneg %p176
      // Predicated region
      $region9: #{tpu_custom_call.1} parent=5 // pred_check
        _
      $region10: #{tpu_custom_call.1} parent=5 // pred_check_branch
        %179 = sbr.rel (%p176) target = $region12
      $region11: #{tpu_custom_call.1} parent=5 // pred_region
        %s180 = ssub.s32 %s14, 1
        // Predicated region
        $region13: #{tpu_custom_call.1} parent=11 // pred_check
          %p181 = pneg %p75
        $region14: #{tpu_custom_call.1} parent=11 // pred_check_branch
          %183 = sbr.rel (%p181) target = $region16
        $region15: #{tpu_custom_call.1} parent=11 // pred_region
          _
        $region16: #{tpu_custom_call.1} parent=11 // pred_fallthru
          _
        // Predicated region
        $region17: #{tpu_custom_call.1} parent=11 // pred_check
          %p184 = pneg %p96
        $region18: #{tpu_custom_call.1} parent=11 // pred_check_branch
          %186 = sbr.rel (%p184) target = $region20
        $region19: #{tpu_custom_call.1} parent=11 // pred_region
          _
        $region20: #{tpu_custom_call.1} parent=11 // pred_fallthru
          _
        // Predicated region
        $region21: #{tpu_custom_call.1} parent=11 // pred_check
          %p187 = pneg %p117
        $region22: #{tpu_custom_call.1} parent=11 // pred_check_branch
          %189 = sbr.rel (%p187) target = $region24
        $region23: #{tpu_custom_call.1} parent=11 // pred_region
          _
        $region24: #{tpu_custom_call.1} parent=11 // pred_fallthru
          _
        // Predicated region
        $region25: #{tpu_custom_call.1} parent=11 // pred_check
          %p190 = pneg %p138
        $region26: #{tpu_custom_call.1} parent=11 // pred_check_branch
          %192 = sbr.rel (%p190) target = $region28
        $region27: #{tpu_custom_call.1} parent=11 // pred_region
          _
        $region28: #{tpu_custom_call.1} parent=11 // pred_fallthru
          _
      $region12: #{tpu_custom_call.1} parent=5 // pred_fallthru
        _
      %p193 = scmp.lt.s32.totalorder %s14, 2
      // Predicated region
      $region29: #{tpu_custom_call.1} parent=5 // pred_check
        %p194 = pneg %p193
      $region30: #{tpu_custom_call.1} parent=5 // pred_check_branch
        %196 = sbr.rel (%p194) target = $region32
      $region31: #{tpu_custom_call.1} parent=5 // pred_region
        // Predicated region
        $region33: #{tpu_custom_call.1} parent=31 // pred_check
          %p197 = pneg %p48
        $region34: #{tpu_custom_call.1} parent=31 // pred_check_branch
          %199 = sbr.rel (%p197) target = $region36
        $region35: #{tpu_custom_call.1} parent=31 // pred_region
          %p200 = scmp.lt.s32.totalorder %s21, 1
          %s201 = scalar_select %p200, %s21, 1
          %p202 = scmp.lt.s32.totalorder %s22, 0
          %s203 = scalar_select %p202, %s22, 0
          %s204 = sadd.s32 %s203, %s201
          %s205 = smul.addr %s204, 8
          %s206 = scalar_lea.vmem %s0, %s205
        $region36: #{tpu_custom_call.1} parent=31 // pred_fallthru
          _
      $region32: #{tpu_custom_call.1} parent=5 // pred_fallthru
        _
      %p207 = scmp.le.s32.totalorder 1, %s14
      %p208 = scmp.lt.s32.totalorder %s14, 3
      %p209 = pnand %p207, %p208
      %p210 = pneg %p209
      // Predicated region
      $region37: #{tpu_custom_call.1} parent=5 // pred_check
        _
      $region38: #{tpu_custom_call.1} parent=5 // pred_check_branch
        %212 = sbr.rel (%p209) target = $region40
      $region39: #{tpu_custom_call.1} parent=5 // pred_region
        %s213 = ssub.s32 %s14, 1
        %p214 = scmp.lt.s32.totalorder %s23, 1
        %s215 = scalar_select %p214, %s23, 1
        %p216 = scmp.lt.s32.totalorder %s24, 0
        %s217 = scalar_select %p216, %s24, 0
        %s218 = sadd.s32 %s217, %s215
        %s219 = smul.addr %s218, 8
        %s220 = scalar_lea.vmem %s0, %s219
        %p221 = pneg %p54
        %p222 = pneg %p51
        %p223 = pneg %p75
        %p224 = pneg %p72
        %p225 = pneg %p96
        %p226 = pneg %p93
        %p227 = pneg %p117
        %p228 = pneg %p114
        %p229 = pneg %p138
        %p230 = pneg %p135
        %p231 = pneg %p166
        %p232 = pneg %p163
        %s233 = sand.u32 %s153, 1
        %s234 = scalar_lea.sflag [#allocation3], %s233
        %s235 = sand.u32 %s153, 1
        %s236 = smul.addr %s235, 4
        %s237 = scalar_lea.vmem [#allocation2], %s236
        %p238 = scmp.lt.s32.totalorder %s23, 1
        %s239 = scalar_select %p238, %s23, 1
        %p240 = scmp.lt.s32.totalorder %s24, 0
        %s241 = scalar_select %p240, %s24, 0
        %s242 = sadd.s32 %s241, %s239
        %s243 = smul.addr %s242, 8
        %s244 = scalar_lea.vmem %s0, %s243
        %v246 = vld [vmem:[%s1] sm:$0xff]
        %v247 = vld [vmem:[%s2] sm:$0xff]
        %v248 = vld [vmem:[%s3] sm:$0x3]
        %v249 = vld [vmem:[%s4] sm:$0xf]
        %v250 = vld [vmem:[%s4 + $0x4] sm:$0xf]
        %v251 = vld [vmem:[%s244] sm:$0xff]
        %253 = vset.pattern.permute.xlu0 0
        %254 = vperm.xlu0 %253, %v246
        %v255 = vpop.permute.xlu0 %254
        %v257 = vmul.f32 %v251, %v255
        %259 = vset.pattern.permute.xlu0 0
        %260 = vperm.xlu0 %259, %v247
        %v261 = vpop.permute.xlu0 %260
        %v263 = vadd.f32 %v257, %v261
        %v264 = vmax.f32 %v263, 0.0
        %v265 = vpack.c.bf16 %v264, %v264
        %v268 = vunpack.c.l.b16 %v249
        %v269 = vunpack.c.l.b16 %v250
        %v270 = vpack.c.b16 %v269, %v268
        %vm272 = vcmask 130048
        %v274 = vsel %vm272, %v265, 0
        %276 = vmatprep.subr.bf16.mxu0 0
        %277 = vmatpush1.bf16.msra.mxu0 %v270
        %278 = vmatprep.subr.bf16.mxu0 0
        %279 = vmatpush1.bf16.msra.mxu0 0
        %280 = vmatprep.subr.bf16.mxu0 0
        %281 = vmatpush1.bf16.msra.mxu0 0
        %282 = vmatprep.subr.bf16.mxu0 0
        %283 = vmatpush1.bf16.msra.mxu0 0
        %284 = vmatprep.subr.bf16.mxu0 0
        %285 = vmatpush1.bf16.msra.mxu0 0
        %286 = vmatprep.subr.bf16.mxu0 0
        %287 = vmatpush1.bf16.msra.mxu0 0
        %288 = vmatprep.subr.bf16.mxu0 0
        %289 = vmatpush1.bf16.msra.mxu0 0
        %290 = vmatprep.subr.bf16.mxu0 0
        %291 = vmatpush1.bf16.msra.mxu0 0
        %292 = vmatprep.subr.bf16.mxu0 0
        %293 = vmatpush1.bf16.msra.mxu0 0
        %294 = vmatprep.subr.bf16.mxu0 0
        %295 = vmatpush1.bf16.msra.mxu0 0
        %296 = vmatprep.subr.bf16.mxu0 0
        %297 = vmatpush1.bf16.msra.mxu0 0
        %298 = vmatprep.subr.bf16.mxu0 0
        %299 = vmatpush1.bf16.msra.mxu0 0
        %300 = vmatprep.subr.bf16.mxu0 0
        %301 = vmatpush1.bf16.msra.mxu0 0
        %302 = vmatprep.subr.bf16.mxu0 0
        %303 = vmatpush1.bf16.msra.mxu0 0
        %304 = vmatprep.subr.bf16.mxu0 0
        %305 = vmatpush1.bf16.msra.mxu0 0
        %306 = vmatprep.subr.bf16.mxu0 0
        %307 = vmatpush1.bf16.msra.mxu0 0
        %308 = vmatprep.mubr.bf16.mxu0 0
        %309 = vmatmul.mubr.bf16.gmra.mrb[0].mxu0 %v274
        %v310 = vpop.f32.mrb[0].mxu0
        %v311 = vadd.f32 0.0, %v310
        %v312 = vpop.f32.mrb[0].mxu0
        %v313 = vpop.f32.mrb[0].mxu0
        %v314 = vpop.f32.mrb[0].mxu0
        %315 = vdwg.mxu0
        %v316 = vpack.c.bf16 %v311, %v311
        %vm317 = vcmask 64512
        %v319 = vsel %vm317, %v248, 0
        %vm321 = vcmask 1043456
        %v323 = vsel %vm321, %v316, 0
        %325 = vmatprep.subr.bf16.mxu0 0
        %326 = vmatpush1.bf16.msra.mxu0 %v323
        %327 = vmatprep.subr.bf16.mxu0 0
        %328 = vmatpush1.bf16.msra.mxu0 0
        %329 = vmatprep.subr.bf16.mxu0 0
        %330 = vmatpush1.bf16.msra.mxu0 0
        %331 = vmatprep.subr.bf16.mxu0 0
        %332 = vmatpush1.bf16.msra.mxu0 0
        %333 = vmatprep.subr.bf16.mxu0 0
        %334 = vmatpush1.bf16.msra.mxu0 0
        %335 = vmatprep.subr.bf16.mxu0 0
        %336 = vmatpush1.bf16.msra.mxu0 0
        %337 = vmatprep.subr.bf16.mxu0 0
        %338 = vmatpush1.bf16.msra.mxu0 0
        %339 = vmatprep.subr.bf16.mxu0 0
        %340 = vmatpush1.bf16.msra.mxu0 0
        %341 = vmatprep.subr.bf16.mxu0 0
        %342 = vmatpush1.bf16.msra.mxu0 0
        %343 = vmatprep.subr.bf16.mxu0 0
        %344 = vmatpush1.bf16.msra.mxu0 0
        %345 = vmatprep.subr.bf16.mxu0 0
        %346 = vmatpush1.bf16.msra.mxu0 0
        %347 = vmatprep.subr.bf16.mxu0 0
        %348 = vmatpush1.bf16.msra.mxu0 0
        %349 = vmatprep.subr.bf16.mxu0 0
        %350 = vmatpush1.bf16.msra.mxu0 0
        %351 = vmatprep.subr.bf16.mxu0 0
        %352 = vmatpush1.bf16.msra.mxu0 0
        %353 = vmatprep.subr.bf16.mxu0 0
        %354 = vmatpush1.bf16.msra.mxu0 0
        %355 = vmatprep.subr.bf16.mxu0 0
        %356 = vmatpush1.bf16.msra.mxu0 0
        %357 = vmatprep.mubr.bf16.mxu0 0
        %358 = vmatmul.mubr.bf16.gmra.mrb[0].mxu0 %v319
        %v359 = vpop.f32.mrb[0].mxu0
        %v360 = vadd.f32 0.0, %v359
        %v361 = vpop.f32.mrb[0].mxu0
        %v362 = vpop.f32.mrb[0].mxu0
        %v363 = vpop.f32.mrb[0].mxu0
        %364 = vdwg.mxu0
        %vm365 = vcmask 60416
        %366 = vst.msk [vmem:[%s237] sm:$0xf] %vm365, %v360
        %s367 = sand.u32 %s153, 1
        %s368 = scalar_lea.sflag [#allocation3], %s367
        %s369 = sand.u32 %s153, 1
        %s370 = smul.addr %s369, 4
        %s371 = scalar_lea.vmem [#allocation2], %s370
        // Predicated region
        $region41: #{tpu_custom_call.1} parent=39 // pred_check
          %p372 = pneg %p163
        $region42: #{tpu_custom_call.1} parent=39 // pred_check_branch
          %374 = sbr.rel (%p372) target = $region44
        $region43: #{tpu_custom_call.1} parent=39 // pred_region
          %s376 = ssub.s32 64, 64
          %377 = vsyncadd %s368, %s376
          %s378 = sadd.s32 %s24, %s23
          %s379 = smul.addr %s378, 64
          %s380 = scalar_lea.hbm %s5, %s379
          %s382 = sshll.u32 %s371, 4
          %s383 = int_to_ptr.vmem [resolvable:$true] %s382
          %385 = dma.vmem_to_hbm [thread:$0]  %s383, 64, %s380, %s368
        $region44: #{tpu_custom_call.1} parent=39 // pred_fallthru
          _
      $region40: #{tpu_custom_call.1} parent=5 // pred_fallthru
        _
      %p386 = scmp.le.s32.totalorder 2, %s14
      // Predicated region
      $region45: #{tpu_custom_call.1} parent=5 // pred_check
        %p387 = pneg %p386
      $region46: #{tpu_custom_call.1} parent=5 // pred_check_branch
        %389 = sbr.rel (%p387) target = $region48
      $region47: #{tpu_custom_call.1} parent=5 // pred_region
        %s390 = ssub.s32 %s14, 2
        // Predicated region
        $region49: #{tpu_custom_call.1} parent=47 // pred_check
          %p391 = pneg %p169
        $region50: #{tpu_custom_call.1} parent=47 // pred_check_branch
          %393 = sbr.rel (%p391) target = $region52
        $region51: #{tpu_custom_call.1} parent=47 // pred_region
          %s394 = sand.u32 %s154, 1
          %s395 = scalar_lea.sflag [#allocation3], %s394
          %s396 = sand.u32 %s154, 1
          %s397 = smul.addr %s396, 4
          %s398 = scalar_lea.vmem [#allocation2], %s397
          %399 = dma.done %s395, 64
        $region52: #{tpu_custom_call.1} parent=47 // pred_fallthru
          _
      $region48: #{tpu_custom_call.1} parent=5 // pred_fallthru
        _
    $region6: #{tpu_custom_call.1} parent=1 // loop_footer
      %s18 = sadd.s32 1, %s14
    $region7: #{tpu_custom_call.1} parent=1 // loop_footer_branch
      %13 = sbr.rel target = $region3
    $region8: #{tpu_custom_call.1} parent=1 // loop_exit
      _
    %400 = vsyncpa [#allocation3], 1
    %s401 = scalar_lea.sflag [#allocation3], 1
    %402 = vsyncpa %s401, 1

</llo_original>
